<compile_context>
chip_gen: v6e
topology: v6e:2x2x1
jax: 0.10.0
libtpu: 0.0.40
codegen_flags: <defaults>
</compile_context>

<pallas_src>
import functools

import jax
import jax.numpy as jnp
from jax.experimental import pallas as pl
from jax.experimental.pallas import tpu as pltpu

LANE = 128
BF16_SUBLANE = 16  # bf16 packs [16, 128] per vreg


def _round_up(n, m):
    return ((n + m - 1) // m) * m


def _cdiv(a, b):
    return -(-a // b)


def _fused_mlp_kernel(x_ref, *refs, num_layers, neg_slope):
    """refs = (w0, s0, w1, s1, ..., w_{L-1}, s_{L-1}, o_ref).

    h_{l+1} = LeakyReLU(h_l @ W_l + shift_l) for hidden layers,
    o       = h_{L-1} @ W_{L-1} + shift_{L-1} for the final layer,
    entirely in vregs/VMEM (activations are a few KiB at these sizes).
    """
    o_ref = refs[-1]
    h = x_ref[...].astype(jnp.bfloat16)  # f32 tile -> bf16 in-register (no HBM pass)
    for l in range(num_layers):
        w_ref = refs[2 * l]
        s_ref = refs[2 * l + 1]
        # bf16 x bf16 -> f32 accumulate on the MXU.
        y = jnp.dot(h, w_ref[...], preferred_element_type=jnp.float32)
        y = y + s_ref[...]  # folded Linear-bias + BatchNorm affine (f32)
        if l < num_layers - 1:
            # LeakyReLU(0 < a < 1) == max(y, a*y): vmul + vmax on the VPU.
            # (Kept in f32: v5e has no bf16 VALU; bf16 epilogue is optional on v6e/v7x.)
            y = jnp.maximum(y, neg_slope * y)
            h = y.astype(jnp.bfloat16)          # bf16 feed to next matmul
        else:
            o_ref[...] = y.astype(o_ref.dtype)  # lane-dense (128-wide) f32 store


def fused_mlp(x, weights, shifts, out_dim, *, neg_slope=0.1,
              max_batch_tile=512, min_split_batch=256):
    """x: [B, Din] f32. weights/shifts: kernel-ready (padded bf16 / f32) params."""
    B, Din = x.shape
    num_layers = len(weights)
    pouts = [w.shape[1] for w in weights]
    pout_last = pouts[-1]

    # ---- batch tiling -----------------------------------------------------
    if B <= max_batch_tile and B < min_split_batch:
        # Single full-array block: no batch padding, block dims equal array dims.
        TB, B_pad = B, B
    else:
        B_pad = _round_up(B, BF16_SUBLANE)
        # >= 2 tiles so the "parallel" axis can shard across both v7x TensorCores.
        n_tiles = max(2, _cdiv(B_pad, max_batch_tile))
        TB = _round_up(_cdiv(B_pad, n_tiles), BF16_SUBLANE)
        B_pad = _round_up(B_pad, TB)
    grid = (B_pad // TB,)

    x_in = x if B_pad == B else jnp.pad(x, ((0, B_pad - B), (0, 0)))

    flat_inputs = [x_in]
    in_specs = [pl.BlockSpec((TB, Din), lambda i: (i, 0))]
    for w, s in zip(weights, shifts):
        flat_inputs += [w, s]
        # Small weights/shifts: constant index_map -> resident across batch tiles.
        in_specs += [pl.BlockSpec(w.shape, lambda i: (0, 0)),
                     pl.BlockSpec(s.shape, lambda i: (0, 0))]

    # ---- VMEM budget (resident weights + double-buffered x/out tiles) ------
    weight_bytes = sum(int(w.size) * w.dtype.itemsize + int(s.size) * s.dtype.itemsize
                       for w, s in zip(weights, shifts))
    io_bytes = 2 * TB * (Din + pout_last) * 4       # double-buffered x / out tiles
    act_bytes = 3 * TB * max(pouts) * 4             # intermediate-activation headroom
    vmem_limit = int(min(max(2 * weight_bytes + io_bytes + act_bytes, 4 << 20),
                         96 << 20))

    flops = 2 * B_pad * sum(w.shape[0] * w.shape[1] for w in weights)
    bytes_accessed = int(x_in.size) * 4 + B_pad * pout_last * 4 + weight_bytes

    kernel = functools.partial(_fused_mlp_kernel,
                               num_layers=num_layers, neg_slope=neg_slope)
    out_pad = pl.pallas_call(
        kernel,
        out_shape=jax.ShapeDtypeStruct((B_pad, pout_last), jnp.float32),
        grid=grid,
        in_specs=in_specs,
        out_specs=pl.BlockSpec((TB, pout_last), lambda i: (i, 0)),
        compiler_params=pltpu.CompilerParams(
            dimension_semantics=("parallel",),      # independent batch tiles
            vmem_limit_bytes=vmem_limit),
        cost_estimate=pl.CostEstimate(flops=flops, transcendentals=0,
                                      bytes_accessed=bytes_accessed),
    )(*flat_inputs)
    return out_pad[:B, :out_dim]


def init_params(key, input_dim, hidden_dims, out_dim=10, *, eps=1e-5):
    """One-time prep: synthetic PyTorch-like params with eval-mode BatchNorm
    folded into the Linear weight/bias, zero-padded to 128-lane widths and
    cast to bf16 (weights) / f32 (shifts) — i.e. already kernel-ready."""
    dims = [input_dim] + list(hidden_dims) + [out_dim]
    num_layers = len(dims) - 1
    weights, shifts = [], []
    for i in range(num_layers):
        prev, h = dims[i], dims[i + 1]
        key, kw, kb, kg, kbeta, km, kv = jax.random.split(key, 7)
        bound = 1.0 / (prev ** 0.5)
        w = jax.random.uniform(kw, (prev, h), jnp.float32, -bound, bound)  # [Din, Dout]
        b = jax.random.uniform(kb, (1, h), jnp.float32, -bound, bound)
        if i < num_layers - 1:  # hidden layer: fold BatchNorm1d (eval mode)
            gamma = 1.0 + 0.1 * jax.random.normal(kg, (1, h), jnp.float32)
            beta = 0.1 * jax.random.normal(kbeta, (1, h), jnp.float32)
            running_mean = 0.1 * jax.random.normal(km, (1, h), jnp.float32)
            running_var = jnp.abs(1.0 + 0.1 * jax.random.normal(kv, (1, h), jnp.float32))
            scale = gamma / jnp.sqrt(running_var + eps)
            # (xW + b)*scale + (beta - mean*scale) == x(W*scale) + shift
            w = w * scale
            b = b * scale + (beta - running_mean * scale)
        # Layer 0 keeps its true row count (x is fed unpadded); deeper layers'
        # rows match the previous layer's 128-padded output width. Padded
        # rows/cols/shift entries are zero, so padded lanes stay exactly 0
        # through LeakyReLU and contribute nothing downstream.
        pin = prev if i == 0 else _round_up(prev, LANE)
        pout = _round_up(h, LANE)
        w_pad = jnp.zeros((pin, pout), jnp.bfloat16).at[:prev, :h].set(
            w.astype(jnp.bfloat16))
        s_pad = jnp.zeros((1, pout), jnp.float32).at[:, :h].set(b)
        weights.append(w_pad)
        shifts.append(s_pad)
    return dict(weights=weights, shifts=shifts, dims=dims)


def reference_forward(x, weights, shifts, out_dim, neg_slope=0.1):
    """Pure-JAX reference with the same bf16-matmul / f32-epilogue numerics,
    run on the same kernel-ready (padded) parameters."""
    h = x.astype(jnp.bfloat16)
    n = len(weights)
    for l, (w, s) in enumerate(zip(weights, shifts)):
        y = jnp.dot(h, w, preferred_element_type=jnp.float32) + s
        if l < n - 1:
            y = jnp.maximum(y, neg_slope * y)
            h = y.astype(jnp.bfloat16)
        else:
            h = y
    return h[:, :out_dim]


if __name__ == "__main__":
    key = jax.random.PRNGKey(0)
    k_in, k_params = jax.random.split(key)

    batch = 8
    input_dim = 32
    hidden_dims = (64, 32)
    out_dim = 10

    x = jax.random.normal(k_in, (batch, input_dim), jnp.float32)
    params = init_params(k_params, input_dim, hidden_dims, out_dim=out_dim)
    weights, shifts = params["weights"], params["shifts"]

    # End-to-end jit: batch pad (if any) and output slice fuse with the kernel.
    fwd = jax.jit(lambda xin: fused_mlp(xin, weights, shifts, out_dim, neg_slope=0.1))

    out = jax.block_until_ready(fwd(x))

    ref = reference_forward(x, weights, shifts, out_dim, neg_slope=0.1)
    assert out.shape == (batch, out_dim), out.shape
    assert jnp.allclose(out, ref, atol=2e-3, rtol=2e-3), "mismatch vs reference"

    print("KERNEL_OK")
</pallas_src>

<mosaic_0001>
module attributes {stable_mosaic.version = 11 : i64} {
  func.func @_fused_mlp_kernel(%arg0: i32, %arg1: memref<8x32xf32, #tpu.memory_space<vmem>>, %arg2: memref<32x128xbf16, #tpu.memory_space<vmem>>, %arg3: memref<1x128xf32, #tpu.memory_space<vmem>>, %arg4: memref<128x128xbf16, #tpu.memory_space<vmem>>, %arg5: memref<1x128xf32, #tpu.memory_space<vmem>>, %arg6: memref<128x128xbf16, #tpu.memory_space<vmem>>, %arg7: memref<1x128xf32, #tpu.memory_space<vmem>>, %arg8: memref<8x128xf32, #tpu.memory_space<vmem>>) attributes {dimension_semantics = [#tpu.dimension_semantics<parallel>], iteration_bounds = array<i64: 1>, scalar_prefetch = 0 : i64, scratch_operands = 0 : i64, tpu.core_type = #tpu.core_type<tc>, window_params = [{transform_indices = @transform_0, window_bounds = array<i64: 8, 32>}, {pipeline_mode = #tpu.pipeline_mode<synchronous>, transform_indices = @transform_1, window_bounds = array<i64: 32, 128>}, {pipeline_mode = #tpu.pipeline_mode<synchronous>, transform_indices = @transform_2, window_bounds = array<i64: 1, 128>}, {pipeline_mode = #tpu.pipeline_mode<synchronous>, transform_indices = @transform_3, window_bounds = array<i64: 128, 128>}, {pipeline_mode = #tpu.pipeline_mode<synchronous>, transform_indices = @transform_4, window_bounds = array<i64: 1, 128>}, {pipeline_mode = #tpu.pipeline_mode<synchronous>, transform_indices = @transform_5, window_bounds = array<i64: 128, 128>}, {pipeline_mode = #tpu.pipeline_mode<synchronous>, transform_indices = @transform_6, window_bounds = array<i64: 1, 128>}, {transform_indices = @transform_7, window_bounds = array<i64: 8, 128>}]} {
    %c0 = arith.constant 0 : index
    %c0_0 = arith.constant 0 : index
    %0 = vector.load %arg1[%c0, %c0_0] : memref<8x32xf32, #tpu.memory_space<vmem>>, vector<8x32xf32>
    %1 = arith.truncf %0 : vector<8x32xf32> to vector<8x32xbf16>
    %c0_1 = arith.constant 0 : index
    %c0_2 = arith.constant 0 : index
    %2 = vector.load %arg2[%c0_1, %c0_2] : memref<32x128xbf16, #tpu.memory_space<vmem>>, vector<32x128xbf16>
    %cst = arith.constant dense<0.000000e+00> : vector<8x128xf32>
    %3 = tpu.matmul %1, %2, %cst {dimension_numbers = #tpu.dot_dimension_numbers<[1], [0], [0], [1], [0, 0, 1, 1], [], []>} : vector<8x32xbf16>, vector<32x128xbf16>, vector<8x128xf32> -> vector<8x128xf32>
    %c0_3 = arith.constant 0 : index
    %c0_4 = arith.constant 0 : index
    %4 = vector.load %arg3[%c0_3, %c0_4] : memref<1x128xf32, #tpu.memory_space<vmem>>, vector<1x128xf32>
    %5 = vector.broadcast %4 : vector<1x128xf32> to vector<8x128xf32>
    %6 = arith.addf %3, %5 : vector<8x128xf32>
    %cst_5 = arith.constant 1.000000e-01 : f32
    %7 = vector.broadcast %cst_5 : f32 to vector<8x128xf32>
    %8 = arith.mulf %7, %6 : vector<8x128xf32>
    %9 = arith.maximumf %6, %8 : vector<8x128xf32>
    %10 = arith.truncf %9 : vector<8x128xf32> to vector<8x128xbf16>
    %c0_6 = arith.constant 0 : index
    %c0_7 = arith.constant 0 : index
    %11 = vector.load %arg4[%c0_6, %c0_7] : memref<128x128xbf16, #tpu.memory_space<vmem>>, vector<128x128xbf16>
    %cst_8 = arith.constant dense<0.000000e+00> : vector<8x128xf32>
    %12 = tpu.matmul %10, %11, %cst_8 {dimension_numbers = #tpu.dot_dimension_numbers<[1], [0], [0], [1], [0, 0, 1, 1], [], []>} : vector<8x128xbf16>, vector<128x128xbf16>, vector<8x128xf32> -> vector<8x128xf32>
    %c0_9 = arith.constant 0 : index
    %c0_10 = arith.constant 0 : index
    %13 = vector.load %arg5[%c0_9, %c0_10] : memref<1x128xf32, #tpu.memory_space<vmem>>, vector<1x128xf32>
    %14 = vector.broadcast %13 : vector<1x128xf32> to vector<8x128xf32>
    %15 = arith.addf %12, %14 : vector<8x128xf32>
    %cst_11 = arith.constant 1.000000e-01 : f32
    %16 = vector.broadcast %cst_11 : f32 to vector<8x128xf32>
    %17 = arith.mulf %16, %15 : vector<8x128xf32>
    %18 = arith.maximumf %15, %17 : vector<8x128xf32>
    %19 = arith.truncf %18 : vector<8x128xf32> to vector<8x128xbf16>
    %c0_12 = arith.constant 0 : index
    %c0_13 = arith.constant 0 : index
    %20 = vector.load %arg6[%c0_12, %c0_13] : memref<128x128xbf16, #tpu.memory_space<vmem>>, vector<128x128xbf16>
    %cst_14 = arith.constant dense<0.000000e+00> : vector<8x128xf32>
    %21 = tpu.matmul %19, %20, %cst_14 {dimension_numbers = #tpu.dot_dimension_numbers<[1], [0], [0], [1], [0, 0, 1, 1], [], []>} : vector<8x128xbf16>, vector<128x128xbf16>, vector<8x128xf32> -> vector<8x128xf32>
    %c0_15 = arith.constant 0 : index
    %c0_16 = arith.constant 0 : index
    %22 = vector.load %arg7[%c0_15, %c0_16] : memref<1x128xf32, #tpu.memory_space<vmem>>, vector<1x128xf32>
    %23 = vector.broadcast %22 : vector<1x128xf32> to vector<8x128xf32>
    %24 = arith.addf %21, %23 : vector<8x128xf32>
    %c0_17 = arith.constant 0 : index
    %c0_18 = arith.constant 0 : index
    %25 = vector.load %arg8[%c0_17, %c0_18] : memref<8x128xf32, #tpu.memory_space<vmem>>, vector<8x128xf32>
    tpu.vector_store %arg8[%c0_17, %c0_18], %24 {strides = array<i32>} : memref<8x128xf32, #tpu.memory_space<vmem>>, vector<8x128xf32>,
    return
  }
  func.func @transform_0(%arg0: i32) -> (i32, i32) {
    %c0_i32 = arith.constant 0 : i32
    %c0_i32_0 = arith.constant 0 : i32
    return %arg0, %c0_i32 : i32, i32
  }
  func.func @transform_1(%arg0: i32) -> (i32, i32) {
    %c0_i32 = arith.constant 0 : i32
    %c0_i32_0 = arith.constant 0 : i32
    %c0_i32_1 = arith.constant 0 : i32
    return %c0_i32, %c0_i32_0 : i32, i32
  }
  func.func @transform_2(%arg0: i32) -> (i32, i32) {
    %c0_i32 = arith.constant 0 : i32
    %c0_i32_0 = arith.constant 0 : i32
    %c0_i32_1 = arith.constant 0 : i32
    return %c0_i32, %c0_i32_0 : i32, i32
  }
  func.func @transform_3(%arg0: i32) -> (i32, i32) {
    %c0_i32 = arith.constant 0 : i32
    %c0_i32_0 = arith.constant 0 : i32
    %c0_i32_1 = arith.constant 0 : i32
    return %c0_i32, %c0_i32_0 : i32, i32
  }
  func.func @transform_4(%arg0: i32) -> (i32, i32) {
    %c0_i32 = arith.constant 0 : i32
    %c0_i32_0 = arith.constant 0 : i32
    %c0_i32_1 = arith.constant 0 : i32
    return %c0_i32, %c0_i32_0 : i32, i32
  }
  func.func @transform_5(%arg0: i32) -> (i32, i32) {
    %c0_i32 = arith.constant 0 : i32
    %c0_i32_0 = arith.constant 0 : i32
    %c0_i32_1 = arith.constant 0 : i32
    return %c0_i32, %c0_i32_0 : i32, i32
  }
  func.func @transform_6(%arg0: i32) -> (i32, i32) {
    %c0_i32 = arith.constant 0 : i32
    %c0_i32_0 = arith.constant 0 : i32
    %c0_i32_1 = arith.constant 0 : i32
    return %c0_i32, %c0_i32_0 : i32, i32
  }
  func.func @transform_7(%arg0: i32) -> (i32, i32) {
    %c0_i32 = arith.constant 0 : i32
    %c0_i32_0 = arith.constant 0 : i32
    return %arg0, %c0_i32 : i32, i32
  }
}

</mosaic_0001>

<llo_original>
// kernel: _lambda_.1
$region0: #{_lambda_.1}
  #allocation0 [shape = 'u32[]', space=smem, size = 0x4, offset = 0x4, fixed_abs, tag = 'smem constant byte address 0x4 - core index']
  #allocation1 [shape = 'u32[144,128]{1,0:T(1,128)}', space=vmem, size = 0x12000, scoped, tag = 'internal scratch']
  %s0 = inlined_call_operand.hbm [shape: f32[8,32], index: 0, kind: input, shape index: {}]
  %s1 = inlined_call_operand.hbm [shape: bf16[32,128], index: 1, kind: input, shape index: {}]
  %s2 = inlined_call_operand.vmem [shape: f32[1,128], index: 2, kind: input, shape index: {}]
  %s3 = inlined_call_operand.hbm [shape: bf16[128,128], index: 3, kind: input, shape index: {}]
  %s4 = inlined_call_operand.vmem [shape: f32[1,128], index: 4, kind: input, shape index: {}]
  %s5 = inlined_call_operand.hbm [shape: bf16[128,128], index: 5, kind: input, shape index: {}]
  %s6 = inlined_call_operand.vmem [shape: f32[1,128], index: 6, kind: input, shape index: {}]
  %s7 = inlined_call_operand.hbm [shape: f32[8,128], index: 7, kind: output, shape index: {}]
  %s8 = sld [smem:[#allocation0]]
  $region54: #{_lambda_.1} parent=0
    _
  %s10 = ssub.s32 1, %s8
  %s11 = scalar_select 0, %s10, %s8
  $region1: #{_lambda_.1} parent=0
    #allocation2 [shape = 'u8[4096]{0}', space=vmem, size = 0x1000, scoped, tag = 'input window, operand 0, single buffered']
    #allocation3 [shape = 's32[1]{0}', space=sflag, size = 0x4, scoped, tag = 'scoped memory for _lambda_.1']
    #allocation4 [shape = 's32[1]{0}', space=sflag, size = 0x4, scoped, tag = 'scoped memory for _lambda_.1']
    #allocation5 [shape = 'u8[8192]{0}', space=vmem, size = 0x2000, scoped, tag = 'input window, operand 1, single buffered']
    #allocation6 [shape = 's32[1]{0}', space=sflag, size = 0x4, scoped, tag = 'scoped memory for _lambda_.1']
    #allocation7 [shape = 'u8[32768]{0}', space=vmem, size = 0x8000, scoped, tag = 'input window, operand 3, single buffered']
    #allocation8 [shape = 'u8[32768]{0}', space=vmem, size = 0x8000, scoped, tag = 'input window, operand 5, single buffered']
    #allocation9 [shape = 's32[1]{0}', space=sflag, size = 0x4, scoped, tag = 'scoped memory for _lambda_.1']
    #allocation10 [shape = 'u8[4096]{0}', space=vmem, size = 0x1000, scoped, tag = 'output window, operand 0, single buffered']
    %12 = vsyncpa [#allocation3], 0
    %13 = vsyncpa [#allocation6], 0
    %14 = vsyncpa [#allocation9], 0
    %15 = vsyncpa [#allocation4], 0
    // Predicated region
    $region2: #{_lambda_.1} parent=1 // pred_check
      _
    $region3: #{_lambda_.1} parent=1 // pred_check_branch
      %17 = sbr.rel (0) target = $region5
    $region4: #{_lambda_.1} parent=1 // pred_region
      %s19 = ssub.s32 128, 128
      %20 = vsyncadd [#allocation3], %s19
      %s22 = sshll.u32 [#allocation2], 4
      %s23 = int_to_ptr.vmem [resolvable:$true] %s22
      %25 = dma.hbm_to_vmem [thread:$0]  %s0, 128, %s23, [#allocation3]
    $region5: #{_lambda_.1} parent=1 // pred_fallthru
      _
    // Predicated region
    $region6: #{_lambda_.1} parent=1 // pred_check
      _
    $region7: #{_lambda_.1} parent=1 // pred_check_branch
      %27 = sbr.rel (0) target = $region9
    $region8: #{_lambda_.1} parent=1 // pred_region
      %s29 = ssub.s32 256, 256
      %30 = vsyncadd [#allocation6], %s29
      %s31 = sshll.u32 [#allocation5], 4
      %s32 = int_to_ptr.vmem [resolvable:$true] %s31
      %37 = dma.hbm_to_vmem [thread:$0]  %s1, 256, %s32, [#allocation6], 64, 64, 4
    $region9: #{_lambda_.1} parent=1 // pred_fallthru
      _
    // Predicated region
    $region10: #{_lambda_.1} parent=1 // pred_check
      _
    $region11: #{_lambda_.1} parent=1 // pred_check_branch
      %39 = sbr.rel (0) target = $region13
    $region12: #{_lambda_.1} parent=1 // pred_region
      _
    $region13: #{_lambda_.1} parent=1 // pred_fallthru
      _
    // Predicated region
    $region14: #{_lambda_.1} parent=1 // pred_check
      _
    $region15: #{_lambda_.1} parent=1 // pred_check_branch
      %41 = sbr.rel (0) target = $region17
    $region16: #{_lambda_.1} parent=1 // pred_region
      %s43 = ssub.s32 1024, 1024
      %44 = vsyncadd [#allocation6], %s43
      %s45 = sshll.u32 [#allocation7], 4
      %s46 = int_to_ptr.vmem [resolvable:$true] %s45
      %51 = dma.hbm_to_vmem [thread:$0]  %s3, 1024, %s46, [#allocation6], 64, 64, 4
    $region17: #{_lambda_.1} parent=1 // pred_fallthru
      _
    // Predicated region
    $region18: #{_lambda_.1} parent=1 // pred_check
      _
    $region19: #{_lambda_.1} parent=1 // pred_check_branch
      %53 = sbr.rel (0) target = $region21
    $region20: #{_lambda_.1} parent=1 // pred_region
      _
    $region21: #{_lambda_.1} parent=1 // pred_fallthru
      _
    // Predicated region
    $region22: #{_lambda_.1} parent=1 // pred_check
      _
    $region23: #{_lambda_.1} parent=1 // pred_check_branch
      %55 = sbr.rel (0) target = $region25
    $region24: #{_lambda_.1} parent=1 // pred_region
      %s57 = ssub.s32 1024, 1024
      %58 = vsyncadd [#allocation9], %s57
      %s59 = sshll.u32 [#allocation8], 4
      %s60 = int_to_ptr.vmem [resolvable:$true] %s59
      %65 = dma.hbm_to_vmem [thread:$0]  %s5, 1024, %s60, [#allocation9], 64, 64, 4
    $region25: #{_lambda_.1} parent=1 // pred_fallthru
      _
    // Predicated region
    $region26: #{_lambda_.1} parent=1 // pred_check
      _
    $region27: #{_lambda_.1} parent=1 // pred_check_branch
      %67 = sbr.rel (0) target = $region29
    $region28: #{_lambda_.1} parent=1 // pred_region
      _
    $region29: #{_lambda_.1} parent=1 // pred_fallthru
      _
    // Predicated region
    $region30: #{_lambda_.1} parent=1 // pred_check
      _
    $region31: #{_lambda_.1} parent=1 // pred_check_branch
      %69 = sbr.rel (0) target = $region33
    $region32: #{_lambda_.1} parent=1 // pred_region
      %70 = dma.done [#allocation3], 128
    $region33: #{_lambda_.1} parent=1 // pred_fallthru
      _
    // Predicated region
    $region34: #{_lambda_.1} parent=1 // pred_check
      _
    $region35: #{_lambda_.1} parent=1 // pred_check_branch
      %72 = sbr.rel (0) target = $region37
    $region36: #{_lambda_.1} parent=1 // pred_region
      %73 = dma.done [#allocation6], 256
    $region37: #{_lambda_.1} parent=1 // pred_fallthru
      _
    // Predicated region
    $region38: #{_lambda_.1} parent=1 // pred_check
      _
    $region39: #{_lambda_.1} parent=1 // pred_check_branch
      %75 = sbr.rel (0) target = $region41
    $region40: #{_lambda_.1} parent=1 // pred_region
      %76 = dma.done [#allocation6], 1024
    $region41: #{_lambda_.1} parent=1 // pred_fallthru
      _
    // Predicated region
    $region42: #{_lambda_.1} parent=1 // pred_check
      _
    $region43: #{_lambda_.1} parent=1 // pred_check_branch
      %78 = sbr.rel (0) target = $region45
    $region44: #{_lambda_.1} parent=1 // pred_region
      %79 = dma.done [#allocation9], 1024
    $region45: #{_lambda_.1} parent=1 // pred_fallthru
      _
    %v81 = vld [vmem:[#allocation2] sm:$0xff]
    %v82 = vpack.c.bf16 %v81, %v81
    %v83 = vld [vmem:[#allocation5] sm:$0xf]
    %v84 = vld [vmem:[#allocation5 + $0x4] sm:$0xf]
    %v85 = vld [vmem:[#allocation5 + $0x8] sm:$0xf]
    %v86 = vld [vmem:[#allocation5 + $0xc] sm:$0xf]
    %v87 = vld [vmem:[%s2] sm:$0x1]
    %v89 = vlaneseq
    %v90 = vshrl.u32 %v89, 7
    %v91 = vsub.s32 0, %v90
    %v92 = vrot.slane %v87, %v91
    %v98 = vunpack.c.l.b16 %v83
    %v99 = vunpack.c.l.b16 %v84
    %v100 = vunpack.c.l.b16 %v85
    %v101 = vunpack.c.l.b16 %v86
    %v102 = vpack.c.b16 %v99, %v98
    %v103 = vpack.c.b16 %v101, %v100
    %vm106 = vcmask 261120
    %v108 = vsel %vm106, %v82, 0
    %110 = vmatprep.subr.bf16.mxu0 0
    %111 = vmatpush1.bf16.msra.mxu0 0
    %112 = vmatprep.subr.bf16.mxu0 0
    %113 = vmatpush1.bf16.msra.mxu0 0
    %114 = vmatprep.subr.bf16.mxu0 0
    %115 = vmatpush1.bf16.msra.mxu0 0
    %116 = vmatprep.subr.bf16.mxu0 0
    %117 = vmatpush1.bf16.msra.mxu0 0
    %118 = vmatprep.subr.bf16.mxu0 0
    %119 = vmatpush1.bf16.msra.mxu0 0
    %120 = vmatprep.subr.bf16.mxu0 0
    %121 = vmatpush1.bf16.msra.mxu0 0
    %122 = vmatprep.subr.bf16.mxu0 0
    %123 = vmatpush1.bf16.msra.mxu0 %v103
    %124 = vmatprep.subr.bf16.mxu0 0
    %125 = vmatpush1.bf16.msra.mxu0 %v102
    %126 = vmatprep.subr.bf16.mxu0 0
    %127 = vmatpush2.bf16.msra.mxu0 0
    %128 = vmatprep.subr.bf16.mxu0 0
    %129 = vmatpush2.bf16.msra.mxu0 0
    %130 = vmatprep.subr.bf16.mxu0 0
    %131 = vmatpush2.bf16.msra.mxu0 0
    %132 = vmatprep.subr.bf16.mxu0 0
    %133 = vmatpush2.bf16.msra.mxu0 0
    %134 = vmatprep.subr.bf16.mxu0 0
    %135 = vmatpush2.bf16.msra.mxu0 0
    %136 = vmatprep.subr.bf16.mxu0 0
    %137 = vmatpush2.bf16.msra.mxu0 0
    %138 = vmatprep.subr.bf16.mxu0 0
    %139 = vmatpush2.bf16.msra.mxu0 0
    %140 = vmatprep.subr.bf16.mxu0 0
    %141 = vmatpush2.bf16.msra.mxu0 0
    %142 = vmatprep.mubr.bf16.mxu0 0
    %143 = vmatmul.mubr.bf16.gmra.mxu0 %v108
    %v144 = vpop.f32.mrf.mxu0
    %v145 = vadd.f32 %v92, %v144
    %v146 = vpop.f32.mrf.mxu0
    %v147 = vpop.f32.mrf.mxu0
    %v148 = vpop.f32.mrf.mxu0
    %149 = vdwg.mxu0
    %v150 = vmul.f32 %v145, 0.1
    %v151 = vmax.f32 %v145, %v150
    %v152 = vpack.c.bf16 %v151, %v151
    %v153 = vld [vmem:[#allocation7] sm:$0xf]
    %v154 = vld [vmem:[#allocation7 + $0x4] sm:$0xf]
    %v155 = vld [vmem:[#allocation7 + $0x8] sm:$0xf]
    %v156 = vld [vmem:[#allocation7 + $0xc] sm:$0xf]
    %v157 = vld [vmem:[#allocation7 + $0x10] sm:$0xf]
    %v158 = vld [vmem:[#allocation7 + $0x14] sm:$0xf]
    %v159 = vld [vmem:[#allocation7 + $0x18] sm:$0xf]
    %v160 = vld [vmem:[#allocation7 + $0x1c] sm:$0xf]
    %v161 = vld [vmem:[#allocation7 + $0x20] sm:$0xf]
    %v162 = vld [vmem:[#allocation7 + $0x24] sm:$0xf]
    %v163 = vld [vmem:[#allocation7 + $0x28] sm:$0xf]
    %v164 = vld [vmem:[#allocation7 + $0x2c] sm:$0xf]
    %v165 = vld [vmem:[#allocation7 + $0x30] sm:$0xf]
    %v166 = vld [vmem:[#allocation7 + $0x34] sm:$0xf]
    %v167 = vld [vmem:[#allocation7 + $0x38] sm:$0xf]
    %v168 = vld [vmem:[#allocation7 + $0x3c] sm:$0xf]
    %v169 = vld [vmem:[%s4] sm:$0x1]
    %v171 = vlaneseq
    %v172 = vshrl.u32 %v171, 7
    %v173 = vsub.s32 0, %v172
    %v174 = vrot.slane %v169, %v173
    %v192 = vunpack.c.l.b16 %v153
    %v193 = vunpack.c.l.b16 %v154
    %v194 = vunpack.c.l.b16 %v155
    %v195 = vunpack.c.l.b16 %v156
    %v196 = vunpack.c.l.b16 %v157
    %v197 = vunpack.c.l.b16 %v158
    %v198 = vunpack.c.l.b16 %v159
    %v199 = vunpack.c.l.b16 %v160
    %v200 = vunpack.c.l.b16 %v161
    %v201 = vunpack.c.l.b16 %v162
    %v202 = vunpack.c.l.b16 %v163
    %v203 = vunpack.c.l.b16 %v164
    %v204 = vunpack.c.l.b16 %v165
    %v205 = vunpack.c.l.b16 %v166
    %v206 = vunpack.c.l.b16 %v167
    %v207 = vunpack.c.l.b16 %v168
    %v208 = vpack.c.b16 %v193, %v192
    %v209 = vpack.c.b16 %v195, %v194
    %v210 = vpack.c.b16 %v197, %v196
    %v211 = vpack.c.b16 %v199, %v198
    %v212 = vpack.c.b16 %v201, %v200
    %v213 = vpack.c.b16 %v203, %v202
    %v214 = vpack.c.b16 %v205, %v204
    %v215 = vpack.c.b16 %v207, %v206
    %224 = vmatprep.subr.bf16.mxu0 0
    %225 = vmatpush1.bf16.msra.mxu0 %v215
    %226 = vmatprep.subr.bf16.mxu0 0
    %227 = vmatpush1.bf16.msra.mxu0 %v214
    %228 = vmatprep.subr.bf16.mxu0 0
    %229 = vmatpush1.bf16.msra.mxu0 %v213
    %230 = vmatprep.subr.bf16.mxu0 0
    %231 = vmatpush1.bf16.msra.mxu0 %v212
    %232 = vmatprep.subr.bf16.mxu0 0
    %233 = vmatpush1.bf16.msra.mxu0 %v211
    %234 = vmatprep.subr.bf16.mxu0 0
    %235 = vmatpush1.bf16.msra.mxu0 %v210
    %236 = vmatprep.subr.bf16.mxu0 0
    %237 = vmatpush1.bf16.msra.mxu0 %v209
    %238 = vmatprep.subr.bf16.mxu0 0
    %239 = vmatpush1.bf16.msra.mxu0 %v208
    %240 = vmatprep.subr.bf16.mxu0 0
    %241 = vmatpush2.bf16.msra.mxu0 0
    %242 = vmatprep.subr.bf16.mxu0 0
    %243 = vmatpush2.bf16.msra.mxu0 0
    %244 = vmatprep.subr.bf16.mxu0 0
    %245 = vmatpush2.bf16.msra.mxu0 0
    %246 = vmatprep.subr.bf16.mxu0 0
    %247 = vmatpush2.bf16.msra.mxu0 0
    %248 = vmatprep.subr.bf16.mxu0 0
    %249 = vmatpush2.bf16.msra.mxu0 0
    %250 = vmatprep.subr.bf16.mxu0 0
    %251 = vmatpush2.bf16.msra.mxu0 0
    %252 = vmatprep.subr.bf16.mxu0 0
    %253 = vmatpush2.bf16.msra.mxu0 0
    %254 = vmatprep.subr.bf16.mxu0 0
    %255 = vmatpush2.bf16.msra.mxu0 0
    %256 = vmatprep.mubr.bf16.mxu0 0
    %257 = vmatmul.mubr.bf16.gmra.mxu0 %v152
    %v258 = vpop.f32.mrf.mxu0
    %v259 = vadd.f32 %v174, %v258
    %v260 = vpop.f32.mrf.mxu0
    %v261 = vpop.f32.mrf.mxu0
    %v262 = vpop.f32.mrf.mxu0
    %263 = vdwg.mxu0
    %v264 = vmul.f32 %v259, 0.1
    %v265 = vmax.f32 %v259, %v264
    %v266 = vpack.c.bf16 %v265, %v265
    %v267 = vld [vmem:[#allocation8] sm:$0xf]
    %v268 = vld [vmem:[#allocation8 + $0x4] sm:$0xf]
    %v269 = vld [vmem:[#allocation8 + $0x8] sm:$0xf]
    %v270 = vld [vmem:[#allocation8 + $0xc] sm:$0xf]
    %v271 = vld [vmem:[#allocation8 + $0x10] sm:$0xf]
    %v272 = vld [vmem:[#allocation8 + $0x14] sm:$0xf]
    %v273 = vld [vmem:[#allocation8 + $0x18] sm:$0xf]
    %v274 = vld [vmem:[#allocation8 + $0x1c] sm:$0xf]
    %v275 = vld [vmem:[#allocation8 + $0x20] sm:$0xf]
    %v276 = vld [vmem:[#allocation8 + $0x24] sm:$0xf]
    %v277 = vld [vmem:[#allocation8 + $0x28] sm:$0xf]
    %v278 = vld [vmem:[#allocation8 + $0x2c] sm:$0xf]
    %v279 = vld [vmem:[#allocation8 + $0x30] sm:$0xf]
    %v280 = vld [vmem:[#allocation8 + $0x34] sm:$0xf]
    %v281 = vld [vmem:[#allocation8 + $0x38] sm:$0xf]
    %v282 = vld [vmem:[#allocation8 + $0x3c] sm:$0xf]
    %v283 = vld [vmem:[%s6] sm:$0x1]
    %v285 = vlaneseq
    %v286 = vshrl.u32 %v285, 7
    %v287 = vsub.s32 0, %v286
    %v288 = vrot.slane %v283, %v287
    %v306 = vunpack.c.l.b16 %v267
    %v307 = vunpack.c.l.b16 %v268
    %v308 = vunpack.c.l.b16 %v269
    %v309 = vunpack.c.l.b16 %v270
    %v310 = vunpack.c.l.b16 %v271
    %v311 = vunpack.c.l.b16 %v272
    %v312 = vunpack.c.l.b16 %v273
    %v313 = vunpack.c.l.b16 %v274
    %v314 = vunpack.c.l.b16 %v275
    %v315 = vunpack.c.l.b16 %v276
    %v316 = vunpack.c.l.b16 %v277
    %v317 = vunpack.c.l.b16 %v278
    %v318 = vunpack.c.l.b16 %v279
    %v319 = vunpack.c.l.b16 %v280
    %v320 = vunpack.c.l.b16 %v281
    %v321 = vunpack.c.l.b16 %v282
    %v322 = vpack.c.b16 %v307, %v306
    %v323 = vpack.c.b16 %v309, %v308
    %v324 = vpack.c.b16 %v311, %v310
    %v325 = vpack.c.b16 %v313, %v312
    %v326 = vpack.c.b16 %v315, %v314
    %v327 = vpack.c.b16 %v317, %v316
    %v328 = vpack.c.b16 %v319, %v318
    %v329 = vpack.c.b16 %v321, %v320
    %338 = vmatprep.subr.bf16.mxu0 0
    %339 = vmatpush1.bf16.msra.mxu0 %v329
    %340 = vmatprep.subr.bf16.mxu0 0
    %341 = vmatpush1.bf16.msra.mxu0 %v328
    %342 = vmatprep.subr.bf16.mxu0 0
    %343 = vmatpush1.bf16.msra.mxu0 %v327
    %344 = vmatprep.subr.bf16.mxu0 0
    %345 = vmatpush1.bf16.msra.mxu0 %v326
    %346 = vmatprep.subr.bf16.mxu0 0
    %347 = vmatpush1.bf16.msra.mxu0 %v325
    %348 = vmatprep.subr.bf16.mxu0 0
    %349 = vmatpush1.bf16.msra.mxu0 %v324
    %350 = vmatprep.subr.bf16.mxu0 0
    %351 = vmatpush1.bf16.msra.mxu0 %v323
    %352 = vmatprep.subr.bf16.mxu0 0
    %353 = vmatpush1.bf16.msra.mxu0 %v322
    %354 = vmatprep.subr.bf16.mxu0 0
    %355 = vmatpush2.bf16.msra.mxu0 0
    %356 = vmatprep.subr.bf16.mxu0 0
    %357 = vmatpush2.bf16.msra.mxu0 0
    %358 = vmatprep.subr.bf16.mxu0 0
    %359 = vmatpush2.bf16.msra.mxu0 0
    %360 = vmatprep.subr.bf16.mxu0 0
    %361 = vmatpush2.bf16.msra.mxu0 0
    %362 = vmatprep.subr.bf16.mxu0 0
    %363 = vmatpush2.bf16.msra.mxu0 0
    %364 = vmatprep.subr.bf16.mxu0 0
    %365 = vmatpush2.bf16.msra.mxu0 0
    %366 = vmatprep.subr.bf16.mxu0 0
    %367 = vmatpush2.bf16.msra.mxu0 0
    %368 = vmatprep.subr.bf16.mxu0 0
    %369 = vmatpush2.bf16.msra.mxu0 0
    %370 = vmatprep.mubr.bf16.mxu0 0
    %371 = vmatmul.mubr.bf16.gmra.mxu0 %v266
    %v372 = vpop.f32.mrf.mxu0
    %v373 = vadd.f32 %v288, %v372
    %v374 = vpop.f32.mrf.mxu0
    %v375 = vpop.f32.mrf.mxu0
    %v376 = vpop.f32.mrf.mxu0
    %377 = vdwg.mxu0
    %378 = vst [vmem:[#allocation10] sm:$0xff] %v373
    // Predicated region
    $region46: #{_lambda_.1} parent=1 // pred_check
      _
    $region47: #{_lambda_.1} parent=1 // pred_check_branch
      %380 = sbr.rel (0) target = $region49
    $region48: #{_lambda_.1} parent=1 // pred_region
      %s382 = ssub.s32 128, 128
      %383 = vsyncadd [#allocation4], %s382
      %s385 = sshll.u32 [#allocation10], 4
      %s386 = int_to_ptr.vmem [resolvable:$true] %s385
      %388 = dma.vmem_to_hbm [thread:$0]  %s386, 128, %s7, [#allocation4]
    $region49: #{_lambda_.1} parent=1 // pred_fallthru
      _
    // Predicated region
    $region50: #{_lambda_.1} parent=1 // pred_check
      _
    $region51: #{_lambda_.1} parent=1 // pred_check_branch
      %390 = sbr.rel (0) target = $region53
    $region52: #{_lambda_.1} parent=1 // pred_region
      %391 = dma.done [#allocation4], 128
    $region53: #{_lambda_.1} parent=1 // pred_fallthru
      _
    %392 = vsyncpa [#allocation3], 1
    %393 = vsyncpa [#allocation6], 1
    %394 = vsyncpa [#allocation9], 1
    %395 = vsyncpa [#allocation4], 1

</llo_original>
